<compile_context>
chip_gen: v5e
topology: v5e:2x2
jax: 0.10.0
libtpu: 0.0.40
codegen_flags: <defaults>
</compile_context>

<pallas_src>
import functools
import random

import numpy as np
import jax
import jax.numpy as jnp
from jax.experimental import pallas as pl
from jax.experimental.pallas import tpu as pltpu

# ----------------------------- config ---------------------------------------
DOWNSAMPLE = 2                       # config.downsample
EMBED_DIM = 32                       # encoder token dim C
LATENT_DIM = 64                      # mu / sigma dim per image (concat -> 128 lanes)
IMG_CH = 3
MULTIPLE_SNR = [1, 4, 7, 10, 13]     # args.multiple_snr = "1,4,7,10,13"

PATCH = 2 ** DOWNSAMPLE
PATCH_DIM = IMG_CH * PATCH * PATCH                    # 48 real patch features
PATCH_PAD = ((PATCH_DIM + 127) // 128) * 128          # 128 -> lane-dense output
B_PAD_MIN = 8                                         # sublane-aligned stat rows
REF_NORM = 1024.0                                     # literal `/ 1024` in reference


# ----------------------------- fused Pallas kernel ---------------------------
def _witt_fused_kernel(x_ref, noise_ref, pool_ref, we_ref, be_ref, wms_ref,
                       bms_ref, wd_ref, bd_ref, snr_ref,
                       recon_ref, stats_ref,
                       *, latent_dim, p_valid, pass_channel):
    x = x_ref[...]                                              # [M, P_PAD] f32

    # ---- encoder: patch embed (bf16 MXU operands, f32 accumulation) ---------
    tokens = jnp.dot(x.astype(jnp.bfloat16), we_ref[...],
                     preferred_element_type=jnp.float32) + be_ref[...]   # [M, C]

    # ---- per-image mean pool via host-precomputed constant pool matrix ------
    pooled = jnp.dot(pool_ref[...], tokens.astype(jnp.bfloat16),
                     preferred_element_type=jnp.float32)        # [B_pad, C]

    # ---- fused mu|sigma projection: one lane-dense 128-wide MXU pass --------
    musig = jnp.dot(pooled.astype(jnp.bfloat16), wms_ref[...],
                    preferred_element_type=jnp.float32) + bms_ref[...]   # [B_pad, 2D]

    # mu in lanes [0, D), sigma in lanes [D, 2D): lane masks, no slices.
    lane_ms = jax.lax.broadcasted_iota(jnp.int32, musig.shape, 1)
    is_mu = lane_ms < latent_dim
    mu2 = jnp.where(is_mu, musig * musig, 0.0)                  # mu = mu.pow(2)
    sigma = jnp.where(is_mu, 0.0, jax.nn.softplus(musig))       # sigma > 0

    inv_snr_latent = snr_ref[0]                                 # 1 / 10**(SNR/10)
    s_mu2 = jnp.sum(mu2, axis=1, keepdims=True)                 # [B_pad, 1]
    s_sig = jnp.sum(sigma, axis=1, keepdims=True)               # [B_pad, 1]

    # ---- AWGN channel (unit noise supplied from outside, scaled in-kernel) --
    # TODO(synk): Channel(args, config) not provided; assumed AWGN with noise
    # power = batch-mean signal power / 10**(chan_param/10).
    if pass_channel:
        pwr = jnp.sum(tokens * tokens) * (
            1.0 / float(tokens.shape[0] * tokens.shape[1]))
        std = jnp.sqrt(pwr * snr_ref[1])
        feat = tokens + noise_ref[...] * std
    else:
        feat = tokens

    # ---- decoder: un-embed + sigmoid (lane-dense 128-wide output) -----------
    recon = jax.nn.sigmoid(
        jnp.dot(feat.astype(jnp.bfloat16), wd_ref[...],
                preferred_element_type=jnp.float32) + bd_ref[...])       # [M, P_PAD]
    recon_ref[...] = recon

    # ---- distortion: sum((x - recon)^2) over the valid lanes only -----------
    # (sigmoid is already in (0,1) so the reference clamp is the identity)
    lane_p = jax.lax.broadcasted_iota(jnp.int32, recon.shape, 1)
    d = jnp.where(lane_p < p_valid, x - recon, 0.0)
    sqsum = jnp.sum(d * d)

    # ---- packed stats tile [B_pad, 128]:  lane0=sum(mu^2)/1024,
    #      lane1=sum(sigma_hat)/1024, lane2=total squared error --------------
    stat_lane = jax.lax.broadcasted_iota(jnp.int32, stats_ref.shape, 1)
    stats = jnp.where(stat_lane == 0, s_mu2 * (1.0 / REF_NORM), 0.0)
    stats = stats + jnp.where(
        stat_lane == 1, (s_sig + inv_snr_latent * s_mu2) * (1.0 / REF_NORM), 0.0)
    stats = stats + jnp.where(stat_lane == 2, sqsum, 0.0)
    stats_ref[...] = stats


def _full_spec(shape):
    n = len(shape)
    return pl.BlockSpec(shape, lambda i, _n=n: (0,) * _n)


def _witt_fused_call(x_pad, noise, pool_mat, params, snr_params, *,
                     latent_dim, pass_channel):
    M, Pp = x_pad.shape
    C = params["w_enc"].shape[1]
    D2 = params["w_musig"].shape[1]
    Bp = pool_mat.shape[0]

    kernel = functools.partial(
        _witt_fused_kernel, latent_dim=latent_dim,
        p_valid=PATCH_DIM, pass_channel=pass_channel)

    smem = pl.BlockSpec(memory_space=pltpu.MemorySpace.SMEM)

    flops = 2 * M * Pp * C + 2 * Bp * M * C + 2 * Bp * C * D2 + 2 * M * C * Pp
    transc = M * Pp + Bp * D2
    bytes_acc = (4 * (2 * M * Pp + M * C + Bp * 128)
                 + 2 * (Pp * C + C * D2 + C * Pp + Bp * M)
                 + 4 * (C + D2 + Pp) + 4 * 2)

    return pl.pallas_call(
        kernel,
        out_shape=(
            jax.ShapeDtypeStruct((M, Pp), jnp.float32),     # recon patches (padded)
            jax.ShapeDtypeStruct((Bp, 128), jnp.float32),   # packed stats
        ),
        grid=(1,),
        in_specs=[
            _full_spec((M, Pp)),                            # x patches
            _full_spec((M, C)),                             # unit AWGN noise
            _full_spec((Bp, M)),                            # mean-pool matrix (bf16)
            _full_spec((Pp, C)), _full_spec((1, C)),        # w_enc (bf16), b_enc
            _full_spec((C, D2)), _full_spec((1, D2)),       # w_musig (bf16), b_musig
            _full_spec((C, Pp)), _full_spec((1, Pp)),       # w_dec (bf16), b_dec
            smem,                                           # [inv_snr_latent, inv_snr_chan]
        ],
        out_specs=(_full_spec((M, Pp)), _full_spec((Bp, 128))),
        compiler_params=pltpu.CompilerParams(
            dimension_semantics=("arbitrary",)),
        cost_estimate=pl.CostEstimate(
            flops=flops, transcendentals=transc, bytes_accessed=bytes_acc),
    )(x_pad, noise, pool_mat,
      params["w_enc"], params["b_enc"].reshape(1, C),
      params["w_musig"], params["b_musig"].reshape(1, D2),
      params["w_dec"], params["b_dec"].reshape(1, Pp),
      snr_params)


# ----------------------------- synthetic encoder / decoder -------------------
# TODO(synk): create_encoder / create_decoder (Swin transformers) are not part
# of the provided module; replaced with a linear patch-embed encoder / un-embed
# decoder with the same I/O contract (feature, mu, sigma) / (recon_image).
def init_params(key):
    ks = jax.random.split(key, 4)
    s = 0.05
    w_enc = s * jax.random.normal(ks[0], (PATCH_DIM, EMBED_DIM), jnp.float32)
    w_enc = jnp.pad(w_enc, ((0, PATCH_PAD - PATCH_DIM), (0, 0)))   # lane-dense pad
    w_mu = s * jax.random.normal(ks[1], (EMBED_DIM, LATENT_DIM), jnp.float32)
    w_sig = s * jax.random.normal(ks[2], (EMBED_DIM, LATENT_DIM), jnp.float32)
    w_dec = s * jax.random.normal(ks[3], (EMBED_DIM, PATCH_DIM), jnp.float32)
    w_dec = jnp.pad(w_dec, ((0, 0), (0, PATCH_PAD - PATCH_DIM)))
    return {
        # MXU operands stored bf16 once; biases stay f32 (added post-accumulate).
        "w_enc": w_enc.astype(jnp.bfloat16),
        "b_enc": jnp.zeros((EMBED_DIM,), jnp.float32),
        "w_musig": jnp.concatenate([w_mu, w_sig], axis=1).astype(jnp.bfloat16),
        "b_musig": jnp.zeros((2 * LATENT_DIM,), jnp.float32),
        "w_dec": w_dec.astype(jnp.bfloat16),
        "b_dec": jnp.zeros((PATCH_PAD,), jnp.float32),
    }


# ----------------------------- device forward --------------------------------
@functools.partial(jax.jit, static_argnames=("pass_channel",))
def _witt_device(params, input_image, noise, pool_mat, group_mat, group_mask,
                 snr_params, *, pass_channel):
    B, Cin, H, W = input_image.shape
    Hp, Wp = H // PATCH, W // PATCH

    # image -> [tokens, patch_dim] (feature axis last -> 128-lane dim), lane-pad
    x_p = input_image.reshape(B, Cin, Hp, PATCH, Wp, PATCH)
    x_p = jnp.transpose(x_p, (0, 2, 4, 1, 3, 5)).reshape(B * Hp * Wp, PATCH_DIM)
    x_pad = jnp.pad(x_p, ((0, 0), (0, PATCH_PAD - PATCH_DIM)))

    recon_pad, stats = _witt_fused_call(
        x_pad, noise, pool_mat, params, snr_params,
        latent_dim=LATENT_DIM, pass_channel=pass_channel)

    # patches -> image (drop padded lanes)
    recon_p = recon_pad[:, :PATCH_DIM]
    recon_image = recon_p.reshape(B, Hp, Wp, Cin, PATCH, PATCH)
    recon_image = jnp.transpose(recon_image, (0, 3, 1, 4, 2, 5)).reshape(B, Cin, H, W)

    # unpack packed stats tile
    mu_sums = stats[:B, 0:1]           # sum(mu^2)/1024 per image
    sig_sums = stats[:B, 1:2]          # sum(sigma_hat)/1024 per image
    sq_sum = stats[0, 2]               # total squared error (valid lanes)

    numel = B * Cin * H * W
    # TODO(synk): Distortion(args) implementation not provided; assumed MSE.
    loss_G_mean = sq_sum / numel
    # MSE(x*255, clamp(r)*255).mean() == 255^2 * MSE(x, clamp(r)).mean() exactly.
    mse_mean = (255.0 ** 2) * loss_G_mean

    # loss_P: static-shape group averaging + validity mask (no recompiles per G)
    mu_grp = jnp.dot(group_mat, mu_sums)       # [B, 1]
    sig_grp = jnp.dot(group_mat, sig_sums)     # [B, 1]
    per_group = (mu_grp + sig_grp - jnp.log(sig_grp + 1e-10))[:, 0]
    loss_P = jnp.sum(per_group * group_mask) / jnp.sum(group_mask)

    return recon_image, mse_mean, loss_G_mean, loss_P


# ----------------------------- WITT forward ----------------------------------
def witt_forward(params, input_image, input_codebook, codeID, H_fading,
                 given_SNR=None, pass_channel=True, noise_seed=0):
    del input_codebook  # accepted for interface parity with the torch module
    B, Cin, H, W = input_image.shape
    Hp, Wp = H // PATCH, W // PATCH
    T = Hp * Wp
    M = B * T

    if given_SNR is None:
        SNR = random.choice(MULTIPLE_SNR + list(H_fading))
        chan_param = SNR
    else:
        # TODO(synk): original sets SNR=None here and crashes on 10**(None/10);
        # we use chan_param for the latent-stats SNR so this path is usable.
        SNR = given_SNR
        chan_param = given_SNR

    # SNR enters the kernel as runtime SMEM scalars -> no recompile per SNR.
    inv_snr_latent = 1.0 / (10.0 ** (SNR / 10.0))
    inv_snr_chan = 1.0 / (10.0 ** (chan_param / 10.0))
    snr_params = jnp.asarray([inv_snr_latent, inv_snr_chan], dtype=jnp.float32)

    # Unit AWGN noise generated with jax.random (no TPU-only PRNG in-kernel).
    noise = jax.random.normal(jax.random.PRNGKey(noise_seed), (M, EMBED_DIM),
                              jnp.float32)

    # Host-precomputed constant per-image mean-pool matrix [B_pad, M].
    B_pad = max(B_PAD_MIN, ((B + 7) // 8) * 8)
    pool_np = np.zeros((B_pad, M), np.float32)
    for b in range(B):
        pool_np[b, b * T:(b + 1) * T] = 1.0 / T
    pool_mat = jnp.asarray(pool_np, dtype=jnp.bfloat16)

    # unique-codeID prefix grouping (reproduces the original `break` semantics),
    # folded into a STATIC-shape [B, B] averaging matrix + validity mask.
    W_list = []
    for imageID in range(B):
        if codeID[imageID] in W_list:
            break
        W_list.append(codeID[imageID])
    gmat = np.zeros((B, B), np.float32)
    gmask = np.zeros((B,), np.float32)
    for i, w in enumerate(W_list):
        members = [j for j in range(B) if codeID[j] == w]
        for j in members:
            gmat[i, j] = 1.0 / len(members)
        gmask[i] = 1.0
    group_mat = jnp.asarray(gmat)
    group_mask = jnp.asarray(gmask)

    recon_image, mse_mean, loss_G_mean, loss_P = _witt_device(
        params, input_image, noise, pool_mat, group_mat, group_mask, snr_params,
        pass_channel=pass_channel)

    feature_numel = M * EMBED_DIM
    CBR = feature_numel / 2 / input_image.size

    return recon_image, CBR, chan_param, mse_mean, loss_G_mean, loss_P


# ----------------------------- main -------------------------------------------
if __name__ == "__main__":
    random.seed(0)
    key = jax.random.PRNGKey(0)
    k_param, k_img, k_cb = jax.random.split(key, 3)

    B, H, W = 4, 16, 16
    input_image = jax.random.uniform(k_img, (B, IMG_CH, H, W), jnp.float32)
    input_codebook = jax.random.normal(k_cb, (16, EMBED_DIM), jnp.float32)
    codeID = [0, 1, 0, 1]          # per-image codebook ids
    H_fading = [3, 7]              # extra fading SNR candidates

    params = init_params(k_param)

    outs = witt_forward(params, input_image, input_codebook, codeID, H_fading,
                        given_SNR=None, pass_channel=True, noise_seed=1234)
    recon_image, CBR, chan_param, mse_mean, loss_G_mean, loss_P = outs

    jax.block_until_ready((recon_image, mse_mean, loss_G_mean, loss_P))

    assert recon_image.shape == input_image.shape
    assert bool(jnp.isfinite(mse_mean)) and bool(jnp.isfinite(loss_P))
    print("KERNEL_OK")
</pallas_src>

<mosaic_0001>
module attributes {stable_mosaic.version = 11 : i64} {
  func.func @_witt_fused_kernel(%arg0: i32, %arg1: memref<64x128xf32, #tpu.memory_space<vmem>>, %arg2: memref<64x32xf32, #tpu.memory_space<vmem>>, %arg3: memref<8x64xbf16, #tpu.memory_space<vmem>>, %arg4: memref<128x32xbf16, #tpu.memory_space<vmem>>, %arg5: memref<1x32xf32, #tpu.memory_space<vmem>>, %arg6: memref<32x128xbf16, #tpu.memory_space<vmem>>, %arg7: memref<1x128xf32, #tpu.memory_space<vmem>>, %arg8: memref<32x128xbf16, #tpu.memory_space<vmem>>, %arg9: memref<1x128xf32, #tpu.memory_space<vmem>>, %arg10: memref<2xf32, #tpu.memory_space<smem>>, %arg11: memref<64x128xf32, #tpu.memory_space<vmem>>, %arg12: memref<8x128xf32, #tpu.memory_space<vmem>>) attributes {dimension_semantics = [#tpu.dimension_semantics<arbitrary>], iteration_bounds = array<i64: 1>, scalar_prefetch = 0 : i64, scratch_operands = 0 : i64, tpu.core_type = #tpu.core_type<tc>, window_params = [{pipeline_mode = #tpu.pipeline_mode<synchronous>, transform_indices = @transform_0, window_bounds = array<i64: 64, 128>}, {pipeline_mode = #tpu.pipeline_mode<synchronous>, transform_indices = @transform_1, window_bounds = array<i64: 64, 32>}, {pipeline_mode = #tpu.pipeline_mode<synchronous>, transform_indices = @transform_2, window_bounds = array<i64: 8, 64>}, {pipeline_mode = #tpu.pipeline_mode<synchronous>, transform_indices = @transform_3, window_bounds = array<i64: 128, 32>}, {pipeline_mode = #tpu.pipeline_mode<synchronous>, transform_indices = @transform_4, window_bounds = array<i64: 1, 32>}, {pipeline_mode = #tpu.pipeline_mode<synchronous>, transform_indices = @transform_5, window_bounds = array<i64: 32, 128>}, {pipeline_mode = #tpu.pipeline_mode<synchronous>, transform_indices = @transform_6, window_bounds = array<i64: 1, 128>}, {pipeline_mode = #tpu.pipeline_mode<synchronous>, transform_indices = @transform_7, window_bounds = array<i64: 32, 128>}, {pipeline_mode = #tpu.pipeline_mode<synchronous>, transform_indices = @transform_8, window_bounds = array<i64: 1, 128>}, {transform_indices = @transform_9, window_bounds = array<i64: 2>}, {pipeline_mode = #tpu.pipeline_mode<synchronous>, transform_indices = @transform_10, window_bounds = array<i64: 64, 128>}, {pipeline_mode = #tpu.pipeline_mode<synchronous>, transform_indices = @transform_11, window_bounds = array<i64: 8, 128>}]} {
    %c0 = arith.constant 0 : index
    %c0_0 = arith.constant 0 : index
    %0 = vector.load %arg1[%c0, %c0_0] : memref<64x128xf32, #tpu.memory_space<vmem>>, vector<64x128xf32>
    %1 = arith.truncf %0 : vector<64x128xf32> to vector<64x128xbf16>
    %c0_1 = arith.constant 0 : index
    %c0_2 = arith.constant 0 : index
    %2 = vector.load %arg4[%c0_1, %c0_2] : memref<128x32xbf16, #tpu.memory_space<vmem>>, vector<128x32xbf16>
    %cst = arith.constant dense<0.000000e+00> : vector<64x32xf32>
    %3 = tpu.matmul %1, %2, %cst {dimension_numbers = #tpu.dot_dimension_numbers<[1], [0], [0], [1], [0, 0, 1, 1], [], []>} : vector<64x128xbf16>, vector<128x32xbf16>, vector<64x32xf32> -> vector<64x32xf32>
    %c0_3 = arith.constant 0 : index
    %c0_4 = arith.constant 0 : index
    %4 = vector.load %arg5[%c0_3, %c0_4] : memref<1x32xf32, #tpu.memory_space<vmem>>, vector<1x32xf32>
    %5 = vector.broadcast %4 : vector<1x32xf32> to vector<64x32xf32>
    %6 = arith.addf %3, %5 : vector<64x32xf32>
    %c0_5 = arith.constant 0 : index
    %c0_6 = arith.constant 0 : index
    %7 = vector.load %arg3[%c0_5, %c0_6] : memref<8x64xbf16, #tpu.memory_space<vmem>>, vector<8x64xbf16>
    %8 = arith.truncf %6 : vector<64x32xf32> to vector<64x32xbf16>
    %cst_7 = arith.constant dense<0.000000e+00> : vector<8x32xf32>
    %9 = tpu.matmul %7, %8, %cst_7 {dimension_numbers = #tpu.dot_dimension_numbers<[1], [0], [0], [1], [0, 0, 1, 1], [], []>} : vector<8x64xbf16>, vector<64x32xbf16>, vector<8x32xf32> -> vector<8x32xf32>
    %10 = arith.truncf %9 : vector<8x32xf32> to vector<8x32xbf16>
    %c0_8 = arith.constant 0 : index
    %c0_9 = arith.constant 0 : index
    %11 = vector.load %arg6[%c0_8, %c0_9] : memref<32x128xbf16, #tpu.memory_space<vmem>>, vector<32x128xbf16>
    %cst_10 = arith.constant dense<0.000000e+00> : vector<8x128xf32>
    %12 = tpu.matmul %10, %11, %cst_10 {dimension_numbers = #tpu.dot_dimension_numbers<[1], [0], [0], [1], [0, 0, 1, 1], [], []>} : vector<8x32xbf16>, vector<32x128xbf16>, vector<8x128xf32> -> vector<8x128xf32>
    %c0_11 = arith.constant 0 : index
    %c0_12 = arith.constant 0 : index
    %13 = vector.load %arg7[%c0_11, %c0_12] : memref<1x128xf32, #tpu.memory_space<vmem>>, vector<1x128xf32>
    %14 = vector.broadcast %13 : vector<1x128xf32> to vector<8x128xf32>
    %15 = arith.addf %12, %14 : vector<8x128xf32>
    %16 = tpu.iota {dimensions = array<i32: 1>} : vector<8x128xi32>
    %c64_i32 = arith.constant 64 : i32
    %17 = vector.broadcast %c64_i32 : i32 to vector<8x128xi32>
    %18 = arith.cmpi slt, %16, %17 : vector<8x128xi32>
    %19 = arith.mulf %15, %15 : vector<8x128xf32>
    %cst_13 = arith.constant 0.000000e+00 : f32
    %20 = vector.broadcast %cst_13 : f32 to vector<8x128xf32>
    %21 = arith.select %18, %19, %20 : vector<8x128xi1>, vector<8x128xf32>
    %cst_14 = arith.constant 0.000000e+00 : f32
    %22 = vector.broadcast %cst_14 : f32 to vector<8x128xf32>
    %23 = arith.maximumf %15, %22 : vector<8x128xf32>
    %24 = vector.broadcast %cst_14 : f32 to vector<8x128xf32>
    %25 = arith.subf %15, %24 : vector<8x128xf32>
    %26 = arith.cmpf one, %25, %25 : vector<8x128xf32>
    %27 = vector.broadcast %cst_14 : f32 to vector<8x128xf32>
    %28 = arith.addf %15, %27 : vector<8x128xf32>
    %29 = math.absf %25 : vector<8x128xf32>
    %cst_15 = arith.constant 0.000000e+00 : f32
    %30 = vector.broadcast %cst_15 : f32 to vector<8x128xf32>
    %31 = arith.subf %30, %29 : vector<8x128xf32>
    %32 = math.exp %31 : vector<8x128xf32>
    %33 = math.log1p %32 : vector<8x128xf32>
    %34 = arith.addf %23, %33 : vector<8x128xf32>
    %35 = arith.select %26, %28, %34 : vector<8x128xi1>, vector<8x128xf32>
    %cst_16 = arith.constant 0.000000e+00 : f32
    %36 = vector.broadcast %cst_16 : f32 to vector<8x128xf32>
    %37 = arith.select %18, %36, %35 : vector<8x128xi1>, vector<8x128xf32>
    %c0_17 = arith.constant 0 : index
    %38 = memref.load %arg10[%c0_17] : memref<2xf32, #tpu.memory_space<smem>>
    %cst_18 = arith.constant dense<0.000000e+00> : vector<8xf32>
    %39 = vector.multi_reduction <add>, %21, %cst_18 [1] : vector<8x128xf32> to vector<8xf32>
    %40 = vector.shape_cast %39 : vector<8xf32> to vector<8x1xf32>
    %cst_19 = arith.constant dense<0.000000e+00> : vector<8xf32>
    %41 = vector.multi_reduction <add>, %37, %cst_19 [1] : vector<8x128xf32> to vector<8xf32>
    %42 = vector.shape_cast %41 : vector<8xf32> to vector<8x1xf32>
    %43 = arith.mulf %6, %6 : vector<64x32xf32>
    %44 = vector.shape_cast %43 : vector<64x32xf32> to vector<1x64x32xf32>
    %cst_20 = arith.constant dense<0.000000e+00> : vector<1xf32>
    %45 = vector.multi_reduction <add>, %44, %cst_20 [1, 2] : vector<1x64x32xf32> to vector<1xf32>
    %46 = vector.shape_cast %45 : vector<1xf32> to vector<1x1x1xf32>
    %47 = vector.extract %46[0, 0, 0] : f32 from vector<1x1x1xf32>
    %cst_21 = arith.constant 4.8828125E-4 : f32
    %48 = arith.mulf %47, %cst_21 : f32
    %c1 = arith.constant 1 : index
    %49 = memref.load %arg10[%c1] : memref<2xf32, #tpu.memory_space<smem>>
    %50 = arith.mulf %48, %49 : f32
    %51 = math.sqrt %50 : f32
    %c0_22 = arith.constant 0 : index
    %c0_23 = arith.constant 0 : index
    %52 = vector.load %arg2[%c0_22, %c0_23] : memref<64x32xf32, #tpu.memory_space<vmem>>, vector<64x32xf32>
    %53 = vector.broadcast %51 : f32 to vector<64x32xf32>
    %54 = arith.mulf %52, %53 : vector<64x32xf32>
    %55 = arith.addf %6, %54 : vector<64x32xf32>
    %56 = arith.truncf %55 : vector<64x32xf32> to vector<64x32xbf16>
    %c0_24 = arith.constant 0 : index
    %c0_25 = arith.constant 0 : index
    %57 = vector.load %arg8[%c0_24, %c0_25] : memref<32x128xbf16, #tpu.memory_space<vmem>>, vector<32x128xbf16>
    %cst_26 = arith.constant dense<0.000000e+00> : vector<64x128xf32>
    %58 = tpu.matmul %56, %57, %cst_26 {dimension_numbers = #tpu.dot_dimension_numbers<[1], [0], [0], [1], [0, 0, 1, 1], [], []>} : vector<64x32xbf16>, vector<32x128xbf16>, vector<64x128xf32> -> vector<64x128xf32>
    %c0_27 = arith.constant 0 : index
    %c0_28 = arith.constant 0 : index
    %59 = vector.load %arg9[%c0_27, %c0_28] : memref<1x128xf32, #tpu.memory_space<vmem>>, vector<1x128xf32>
    %60 = vector.broadcast %59 : vector<1x128xf32> to vector<64x128xf32>
    %61 = arith.addf %58, %60 : vector<64x128xf32>
    %62 = arith.negf %61 : vector<64x128xf32>
    %63 = math.exp %62 : vector<64x128xf32>
    %cst_29 = arith.constant 1.000000e+00 : f32
    %64 = vector.broadcast %cst_29 : f32 to vector<64x128xf32>
    %65 = arith.addf %64, %63 : vector<64x128xf32>
    %66 = arith.divf %64, %65 : vector<64x128xf32>
    %c0_30 = arith.constant 0 : index
    %c0_31 = arith.constant 0 : index
    %67 = vector.load %arg11[%c0_30, %c0_31] : memref<64x128xf32, #tpu.memory_space<vmem>>, vector<64x128xf32>
    tpu.vector_store %arg11[%c0_30, %c0_31], %66 {strides = array<i32>} : memref<64x128xf32, #tpu.memory_space<vmem>>, vector<64x128xf32>,
    %68 = tpu.iota {dimensions = array<i32: 1>} : vector<64x128xi32>
    %c48_i32 = arith.constant 48 : i32
    %69 = vector.broadcast %c48_i32 : i32 to vector<64x128xi32>
    %70 = arith.cmpi slt, %68, %69 : vector<64x128xi32>
    %71 = arith.subf %0, %66 : vector<64x128xf32>
    %cst_32 = arith.constant 0.000000e+00 : f32
    %72 = vector.broadcast %cst_32 : f32 to vector<64x128xf32>
    %73 = arith.select %70, %71, %72 : vector<64x128xi1>, vector<64x128xf32>
    %74 = arith.mulf %73, %73 : vector<64x128xf32>
    %75 = vector.shape_cast %74 : vector<64x128xf32> to vector<1x64x128xf32>
    %cst_33 = arith.constant dense<0.000000e+00> : vector<1xf32>
    %76 = vector.multi_reduction <add>, %75, %cst_33 [1, 2] : vector<1x64x128xf32> to vector<1xf32>
    %77 = vector.shape_cast %76 : vector<1xf32> to vector<1x1x1xf32>
    %78 = vector.extract %77[0, 0, 0] : f32 from vector<1x1x1xf32>
    %79 = tpu.iota {dimensions = array<i32: 1>} : vector<8x128xi32>
    %c0_i32 = arith.constant 0 : i32
    %80 = vector.broadcast %c0_i32 : i32 to vector<8x128xi32>
    %81 = arith.cmpi eq, %79, %80 : vector<8x128xi32>
    %cst_34 = arith.constant 9.765625E-4 : f32
    %82 = vector.broadcast %cst_34 : f32 to vector<8x1xf32>
    %83 = arith.mulf %40, %82 : vector<8x1xf32>
    %cst_35 = arith.constant 0.000000e+00 : f32
    %84 = vector.shape_cast %83 : vector<8x1xf32> to vector<8x1xf32>
    %85 = vector.broadcast %84 : vector<8x1xf32> to vector<8x128xf32>
    %86 = vector.broadcast %cst_35 : f32 to vector<8x128xf32>
    %87 = arith.select %81, %85, %86 : vector<8x128xi1>, vector<8x128xf32>
    %c1_i32 = arith.constant 1 : i32
    %88 = vector.broadcast %c1_i32 : i32 to vector<8x128xi32>
    %89 = arith.cmpi eq, %79, %88 : vector<8x128xi32>
    %90 = vector.broadcast %38 : f32 to vector<8x1xf32>
    %91 = arith.mulf %90, %40 : vector<8x1xf32>
    %92 = arith.addf %42, %91 : vector<8x1xf32>
    %cst_36 = arith.constant 9.765625E-4 : f32
    %93 = vector.broadcast %cst_36 : f32 to vector<8x1xf32>
    %94 = arith.mulf %92, %93 : vector<8x1xf32>
    %cst_37 = arith.constant 0.000000e+00 : f32
    %95 = vector.shape_cast %94 : vector<8x1xf32> to vector<8x1xf32>
    %96 = vector.broadcast %95 : vector<8x1xf32> to vector<8x128xf32>
    %97 = vector.broadcast %cst_37 : f32 to vector<8x128xf32>
    %98 = arith.select %89, %96, %97 : vector<8x128xi1>, vector<8x128xf32>
    %99 = arith.addf %87, %98 : vector<8x128xf32>
    %c2_i32 = arith.constant 2 : i32
    %100 = vector.broadcast %c2_i32 : i32 to vector<8x128xi32>
    %101 = arith.cmpi eq, %79, %100 : vector<8x128xi32>
    %cst_38 = arith.constant 0.000000e+00 : f32
    %102 = vector.broadcast %78 : f32 to vector<8x128xf32>
    %103 = vector.broadcast %cst_38 : f32 to vector<8x128xf32>
    %104 = arith.select %101, %102, %103 : vector<8x128xi1>, vector<8x128xf32>
    %105 = arith.addf %99, %104 : vector<8x128xf32>
    %c0_39 = arith.constant 0 : index
    %c0_40 = arith.constant 0 : index
    %106 = vector.load %arg12[%c0_39, %c0_40] : memref<8x128xf32, #tpu.memory_space<vmem>>, vector<8x128xf32>
    tpu.vector_store %arg12[%c0_39, %c0_40], %105 {strides = array<i32>} : memref<8x128xf32, #tpu.memory_space<vmem>>, vector<8x128xf32>,
    return
  }
  func.func @transform_0(%arg0: i32) -> (i32, i32) {
    %c0_i32 = arith.constant 0 : i32
    %c0_i32_0 = arith.constant 0 : i32
    %c0_i32_1 = arith.constant 0 : i32
    return %c0_i32, %c0_i32_0 : i32, i32
  }
  func.func @transform_1(%arg0: i32) -> (i32, i32) {
    %c0_i32 = arith.constant 0 : i32
    %c0_i32_0 = arith.constant 0 : i32
    %c0_i32_1 = arith.constant 0 : i32
    return %c0_i32, %c0_i32_0 : i32, i32
  }
  func.func @transform_2(%arg0: i32) -> (i32, i32) {
    %c0_i32 = arith.constant 0 : i32
    %c0_i32_0 = arith.constant 0 : i32
    %c0_i32_1 = arith.constant 0 : i32
    return %c0_i32, %c0_i32_0 : i32, i32
  }
  func.func @transform_3(%arg0: i32) -> (i32, i32) {
    %c0_i32 = arith.constant 0 : i32
    %c0_i32_0 = arith.constant 0 : i32
    %c0_i32_1 = arith.constant 0 : i32
    return %c0_i32, %c0_i32_0 : i32, i32
  }
  func.func @transform_4(%arg0: i32) -> (i32, i32) {
    %c0_i32 = arith.constant 0 : i32
    %c0_i32_0 = arith.constant 0 : i32
    %c0_i32_1 = arith.constant 0 : i32
    return %c0_i32, %c0_i32_0 : i32, i32
  }
  func.func @transform_5(%arg0: i32) -> (i32, i32) {
    %c0_i32 = arith.constant 0 : i32
    %c0_i32_0 = arith.constant 0 : i32
    %c0_i32_1 = arith.constant 0 : i32
    return %c0_i32, %c0_i32_0 : i32, i32
  }
  func.func @transform_6(%arg0: i32) -> (i32, i32) {
    %c0_i32 = arith.constant 0 : i32
    %c0_i32_0 = arith.constant 0 : i32
    %c0_i32_1 = arith.constant 0 : i32
    return %c0_i32, %c0_i32_0 : i32, i32
  }
  func.func @transform_7(%arg0: i32) -> (i32, i32) {
    %c0_i32 = arith.constant 0 : i32
    %c0_i32_0 = arith.constant 0 : i32
    %c0_i32_1 = arith.constant 0 : i32
    return %c0_i32, %c0_i32_0 : i32, i32
  }
  func.func @transform_8(%arg0: i32) -> (i32, i32) {
    %c0_i32 = arith.constant 0 : i32
    %c0_i32_0 = arith.constant 0 : i32
    %c0_i32_1 = arith.constant 0 : i32
    return %c0_i32, %c0_i32_0 : i32, i32
  }
  func.func @transform_9(%arg0: i32) -> i32 {
    %c0_i32 = arith.constant 0 : i32
    %c0_i32_0 = arith.constant 0 : i32
    return %c0_i32 : i32
  }
  func.func @transform_10(%arg0: i32) -> (i32, i32) {
    %c0_i32 = arith.constant 0 : i32
    %c0_i32_0 = arith.constant 0 : i32
    %c0_i32_1 = arith.constant 0 : i32
    return %c0_i32, %c0_i32_0 : i32, i32
  }
  func.func @transform_11(%arg0: i32) -> (i32, i32) {
    %c0_i32 = arith.constant 0 : i32
    %c0_i32_0 = arith.constant 0 : i32
    %c0_i32_1 = arith.constant 0 : i32
    return %c0_i32, %c0_i32_0 : i32, i32
  }
}

</mosaic_0001>

<llo_original>
// kernel: _witt_device.1
$region0: #{_witt_device.1}
  #allocation0 [shape = 'u32[]', space=smem, size = 0x4, offset = 0x4, fixed_abs, tag = 'smem constant byte address 0x4 - core index']
  #allocation1 [shape = 'u32[72,128]{1,0:T(1,128)}', space=vmem, size = 0x9000, scoped, tag = 'internal scratch']
  %s0 = inlined_call_operand.vmem [shape: f32[64,128], index: 0, kind: input, shape index: {}]
  %s1 = inlined_call_operand.vmem [shape: f32[64,32], index: 1, kind: input, shape index: {}]
  %s2 = inlined_call_operand.vmem [shape: bf16[8,64], index: 2, kind: input, shape index: {}]
  %s3 = inlined_call_operand.vmem [shape: bf16[128,32], index: 3, kind: input, shape index: {}]
  %s4 = inlined_call_operand.vmem [shape: f32[1,32], index: 4, kind: input, shape index: {}]
  %s5 = inlined_call_operand.vmem [shape: bf16[32,128], index: 5, kind: input, shape index: {}]
  %s6 = inlined_call_operand.vmem [shape: f32[1,128], index: 6, kind: input, shape index: {}]
  %s7 = inlined_call_operand.vmem [shape: bf16[32,128], index: 7, kind: input, shape index: {}]
  %s8 = inlined_call_operand.vmem [shape: f32[1,128], index: 8, kind: input, shape index: {}]
  %s9 = inlined_call_operand.vmem [shape: f32[2], index: 9, kind: input, shape index: {}]
  %s10 = inlined_call_operand.vmem [shape: f32[64,128], index: 10, kind: output, shape index: {0}]
  %s11 = inlined_call_operand.vmem [shape: f32[8,128], index: 11, kind: output, shape index: {1}]
  %12 = xla_tuple %s10, %s11
  %s13 = sld [smem:[#allocation0]]
  $region62: #{_witt_device.1} parent=0
    _
  %s15 = ssub.s32 1, %s13
  %s16 = scalar_select 0, %s15, %s13
  $region1: #{_witt_device.1} parent=0
    #allocation2 [shape = 'u8[512]{0}', space=smem, size = 0x200, scoped, tag = 'input window, operand 9, single buffered']
    #allocation3 [shape = 's32[1]{0}', space=sflag, size = 0x4, scoped, tag = 'scoped memory for _witt_device.1']
    %17 = vsyncpa [#allocation3], 0
    // Predicated region
    $region2: #{_witt_device.1} parent=1 // pred_check
      _
    $region3: #{_witt_device.1} parent=1 // pred_check_branch
      %19 = sbr.rel (0) target = $region5
    $region4: #{_witt_device.1} parent=1 // pred_region
      _
    $region5: #{_witt_device.1} parent=1 // pred_fallthru
      _
    // Predicated region
    $region6: #{_witt_device.1} parent=1 // pred_check
      _
    $region7: #{_witt_device.1} parent=1 // pred_check_branch
      %21 = sbr.rel (0) target = $region9
    $region8: #{_witt_device.1} parent=1 // pred_region
      _
    $region9: #{_witt_device.1} parent=1 // pred_fallthru
      _
    // Predicated region
    $region10: #{_witt_device.1} parent=1 // pred_check
      _
    $region11: #{_witt_device.1} parent=1 // pred_check_branch
      %23 = sbr.rel (0) target = $region13
    $region12: #{_witt_device.1} parent=1 // pred_region
      _
    $region13: #{_witt_device.1} parent=1 // pred_fallthru
      _
    // Predicated region
    $region14: #{_witt_device.1} parent=1 // pred_check
      _
    $region15: #{_witt_device.1} parent=1 // pred_check_branch
      %25 = sbr.rel (0) target = $region17
    $region16: #{_witt_device.1} parent=1 // pred_region
      _
    $region17: #{_witt_device.1} parent=1 // pred_fallthru
      _
    // Predicated region
    $region18: #{_witt_device.1} parent=1 // pred_check
      _
    $region19: #{_witt_device.1} parent=1 // pred_check_branch
      %27 = sbr.rel (0) target = $region21
    $region20: #{_witt_device.1} parent=1 // pred_region
      _
    $region21: #{_witt_device.1} parent=1 // pred_fallthru
      _
    // Predicated region
    $region22: #{_witt_device.1} parent=1 // pred_check
      _
    $region23: #{_witt_device.1} parent=1 // pred_check_branch
      %29 = sbr.rel (0) target = $region25
    $region24: #{_witt_device.1} parent=1 // pred_region
      _
    $region25: #{_witt_device.1} parent=1 // pred_fallthru
      _
    // Predicated region
    $region26: #{_witt_device.1} parent=1 // pred_check
      _
    $region27: #{_witt_device.1} parent=1 // pred_check_branch
      %31 = sbr.rel (0) target = $region29
    $region28: #{_witt_device.1} parent=1 // pred_region
      _
    $region29: #{_witt_device.1} parent=1 // pred_fallthru
      _
    // Predicated region
    $region30: #{_witt_device.1} parent=1 // pred_check
      _
    $region31: #{_witt_device.1} parent=1 // pred_check_branch
      %33 = sbr.rel (0) target = $region33
    $region32: #{_witt_device.1} parent=1 // pred_region
      _
    $region33: #{_witt_device.1} parent=1 // pred_fallthru
      _
    // Predicated region
    $region34: #{_witt_device.1} parent=1 // pred_check
      _
    $region35: #{_witt_device.1} parent=1 // pred_check_branch
      %35 = sbr.rel (0) target = $region37
    $region36: #{_witt_device.1} parent=1 // pred_region
      _
    $region37: #{_witt_device.1} parent=1 // pred_fallthru
      _
    // Predicated region
    $region38: #{_witt_device.1} parent=1 // pred_check
      _
    $region39: #{_witt_device.1} parent=1 // pred_check_branch
      %37 = sbr.rel (0) target = $region41
    $region40: #{_witt_device.1} parent=1 // pred_region
      %39 = vsyncadd [#allocation3], 0
      %s41 = sshll.u32 %s9, 4
      %s42 = int_to_ptr.vmem [resolvable:$true] %s41
      %44 = dma.vmem_to_smem %s42, 16, [#allocation2], [#allocation3]
    $region41: #{_witt_device.1} parent=1 // pred_fallthru
      _
    // Predicated region
    $region42: #{_witt_device.1} parent=1 // pred_check
      _
    $region43: #{_witt_device.1} parent=1 // pred_check_branch
      %46 = sbr.rel (0) target = $region45
    $region44: #{_witt_device.1} parent=1 // pred_region
      %48 = dma.done [#allocation3], 16
    $region45: #{_witt_device.1} parent=1 // pred_fallthru
      _
    %49 = sfence
    %v51 = vld [vmem:[%s0] sm:$0xff]
    %v52 = vld [vmem:[%s0 + $0x8] sm:$0xff]
    %v53 = vld [vmem:[%s0 + $0x10] sm:$0xff]
    %v54 = vld [vmem:[%s0 + $0x18] sm:$0xff]
    %v55 = vld [vmem:[%s0 + $0x20] sm:$0xff]
    %v56 = vld [vmem:[%s0 + $0x28] sm:$0xff]
    %v57 = vld [vmem:[%s0 + $0x30] sm:$0xff]
    %v58 = vld [vmem:[%s0 + $0x38] sm:$0xff]
    %v59 = vpack.c.bf16 %v52, %v51
    %v60 = vpack.c.bf16 %v54, %v53
    %v61 = vpack.c.bf16 %v56, %v55
    %v62 = vpack.c.bf16 %v58, %v57
    %v63 = vld [vmem:[%s3] sm:$0xf]
    %v64 = vld [vmem:[%s3 + $0x4] sm:$0xf]
    %v65 = vld [vmem:[%s3 + $0x8] sm:$0xf]
    %v66 = vld [vmem:[%s3 + $0xc] sm:$0xf]
    %v67 = vld [vmem:[%s3 + $0x10] sm:$0xf]
    %v68 = vld [vmem:[%s3 + $0x14] sm:$0xf]
    %v69 = vld [vmem:[%s3 + $0x18] sm:$0xf]
    %v70 = vld [vmem:[%s3 + $0x1c] sm:$0xf]
    %v71 = vld [vmem:[%s3 + $0x20] sm:$0xf]
    %v72 = vld [vmem:[%s3 + $0x24] sm:$0xf]
    %v73 = vld [vmem:[%s3 + $0x28] sm:$0xf]
    %v74 = vld [vmem:[%s3 + $0x2c] sm:$0xf]
    %v75 = vld [vmem:[%s3 + $0x30] sm:$0xf]
    %v76 = vld [vmem:[%s3 + $0x34] sm:$0xf]
    %v77 = vld [vmem:[%s3 + $0x38] sm:$0xf]
    %v78 = vld [vmem:[%s3 + $0x3c] sm:$0xf]
    %v79 = vld [vmem:[%s4] sm:$0x1]
    %v81 = vperm.slane %v79, 0
    %v99 = vunpack.c.l.b16 %v63
    %v100 = vunpack.c.l.b16 %v64
    %v101 = vunpack.c.l.b16 %v65
    %v102 = vunpack.c.l.b16 %v66
    %v103 = vunpack.c.l.b16 %v67
    %v104 = vunpack.c.l.b16 %v68
    %v105 = vunpack.c.l.b16 %v69
    %v106 = vunpack.c.l.b16 %v70
    %v107 = vunpack.c.l.b16 %v71
    %v108 = vunpack.c.l.b16 %v72
    %v109 = vunpack.c.l.b16 %v73
    %v110 = vunpack.c.l.b16 %v74
    %v111 = vunpack.c.l.b16 %v75
    %v112 = vunpack.c.l.b16 %v76
    %v113 = vunpack.c.l.b16 %v77
    %v114 = vunpack.c.l.b16 %v78
    %v115 = vpack.c.b16 %v100, %v99
    %v116 = vpack.c.b16 %v102, %v101
    %v117 = vpack.c.b16 %v104, %v103
    %v118 = vpack.c.b16 %v106, %v105
    %v119 = vpack.c.b16 %v108, %v107
    %v120 = vpack.c.b16 %v110, %v109
    %v121 = vpack.c.b16 %v112, %v111
    %v122 = vpack.c.b16 %v114, %v113
    %131 = vmatpush.bf16.msra.mxu0 %v122
    %132 = vmatpush.bf16.msra.mxu0 %v121
    %133 = vmatpush.bf16.msra.mxu0 %v120
    %134 = vmatpush.bf16.msra.mxu0 %v119
    %135 = vmatpush.bf16.msra.mxu0 %v118
    %136 = vmatpush.bf16.msra.mxu0 %v117
    %137 = vmatpush.bf16.msra.mxu0 %v116
    %138 = vmatpush.bf16.msra.mxu0 %v115
    %139 = vmatmul.bf16.gmra.mxu0 %v59
    %v140 = vpop.f32.mrf.mxu0
    %v141 = vadd.f32 %v81, %v140
    %v142 = vpop.f32.mrf.mxu0
    %v143 = vadd.f32 %v81, %v142
    %144 = vmatmul.bf16.gmra.mxu0 %v60
    %v145 = vpop.f32.mrf.mxu0
    %v146 = vadd.f32 %v81, %v145
    %v147 = vpop.f32.mrf.mxu0
    %v148 = vadd.f32 %v81, %v147
    %149 = vmatmul.bf16.gmra.mxu0 %v61
    %v150 = vpop.f32.mrf.mxu0
    %v151 = vadd.f32 %v81, %v150
    %v152 = vpop.f32.mrf.mxu0
    %v153 = vadd.f32 %v81, %v152
    %154 = vmatmul.bf16.gmra.mxu0 %v62
    %v155 = vpop.f32.mrf.mxu0
    %v156 = vadd.f32 %v81, %v155
    %v157 = vpop.f32.mrf.mxu0
    %v158 = vadd.f32 %v81, %v157
    %159 = vdwg.mxu0
    %v160 = vld [vmem:[%s2] sm:$0xf]
    %v161 = vpack.c.bf16 %v143, %v141
    %v162 = vpack.c.bf16 %v148, %v146
    %v163 = vpack.c.bf16 %v153, %v151
    %v164 = vpack.c.bf16 %v158, %v156
    %vm165 = vcmask 523264
    %v167 = vsel %vm165, %v160, 0
    %169 = vmatpush.bf16.msra.mxu0 0
    %170 = vmatpush.bf16.msra.mxu0 0
    %171 = vmatpush.bf16.msra.mxu0 0
    %172 = vmatpush.bf16.msra.mxu0 0
    %173 = vmatpush.bf16.msra.mxu0 %v164
    %174 = vmatpush.bf16.msra.mxu0 %v163
    %175 = vmatpush.bf16.msra.mxu0 %v162
    %176 = vmatpush.bf16.msra.mxu0 %v161
    %177 = vmatmul.bf16.gmra.mxu0 %v167
    %v178 = vpop.f32.mrf.mxu0
    %v179 = vadd.f32 0.0, %v178
    %v180 = vpop.f32.mrf.mxu0
    %181 = vdwg.mxu0
    %v182 = vpack.c.bf16 %v179, %v179
    %v183 = vld [vmem:[%s5] sm:$0xf]
    %v184 = vld [vmem:[%s5 + $0x4] sm:$0xf]
    %v185 = vld [vmem:[%s5 + $0x8] sm:$0xf]
    %v186 = vld [vmem:[%s5 + $0xc] sm:$0xf]
    %v187 = vld [vmem:[%s6] sm:$0x1]
    %v189 = vperm.slane %v187, 0
    %v195 = vunpack.c.l.b16 %v183
    %v196 = vunpack.c.l.b16 %v184
    %v197 = vunpack.c.l.b16 %v185
    %v198 = vunpack.c.l.b16 %v186
    %v199 = vpack.c.b16 %v196, %v195
    %v200 = vpack.c.b16 %v198, %v197
    %vm203 = vcmask 261120
    %v205 = vsel %vm203, %v182, 0
    %207 = vmatpush.bf16.msra.mxu0 0
    %208 = vmatpush.bf16.msra.mxu0 0
    %209 = vmatpush.bf16.msra.mxu0 0
    %210 = vmatpush.bf16.msra.mxu0 0
    %211 = vmatpush.bf16.msra.mxu0 0
    %212 = vmatpush.bf16.msra.mxu0 0
    %213 = vmatpush.bf16.msra.mxu0 %v200
    %214 = vmatpush.bf16.msra.mxu0 %v199
    %215 = vmatmul.bf16.gmra.mxu0 %v205
    %v216 = vpop.f32.mrf.mxu0
    %v217 = vadd.f32 %v189, %v216
    %v218 = vpop.f32.mrf.mxu0
    %219 = vdwg.mxu0
    %v220 = vlaneseq
    %v221 = vand.u32 %v220, 127
    %vm222 = vcmp.lt.s32.totalorder %v221, 64
    %v223 = vmul.f32 %v217, %v217
    %v224 = vsel %vm222, %v223, 0.0
    %v225 = vmax.f32 %v217, 0.0
    %vm226 = vcmp.ne.f32.partialorder %v217, %v217
    %v227 = vadd.f32 %v217, 0.0
    %v228 = vand.u32 2147483647, %v217
    %v229 = vsub.f32 0.0, %v228
    %v230 = vmul.f32 %v229, 1.442695
    %v231 = vpow.pop %v230
    %v232 = vadd.f32 %v231, 1.0
    %v233 = vlog2.pop %v232
    %v234 = vmul.f32 %v233, 0.6931472
    %v235 = vmul.f32 -0.5, %v231
    %v236 = vadd.f32 %v235, 1.0
    %v237 = vmul.f32 %v236, %v231
    %v238 = vand.u32 2147483647, %v231
    %vm239 = vcmp.lt.f32.partialorder %v238, 0.0004427343
    %v240 = vsel %vm239, %v237, %v234
    %v241 = vadd.f32 %v225, %v240
    %v242 = vsel %vm226, %v227, %v241
    %v243 = vsel %vm222, 0.0, %v242
    %s244 = sld [smem:[#allocation2]]
    %245 = vadd.xlane.f32.xlu0 %v224
    %v246 = vpop.xlane.xlu0 %245
    %247 = vadd.xlane.f32.xlu0 %v243
    %v248 = vpop.xlane.xlu0 %247
    %v249 = vmul.f32 %v141, %v141
    %v250 = vmul.f32 %v143, %v143
    %v251 = vmul.f32 %v146, %v146
    %v252 = vmul.f32 %v148, %v148
    %v253 = vmul.f32 %v151, %v151
    %v254 = vmul.f32 %v153, %v153
    %v255 = vmul.f32 %v156, %v156
    %v256 = vmul.f32 %v158, %v158
    %v257 = vsel %vm203, %v249, 0.0
    %v258 = vsel %vm203, %v250, 0.0
    %v259 = vadd.f32 %v257, %v258
    %v260 = vsel %vm203, %v251, 0.0
    %v261 = vadd.f32 %v259, %v260
    %v262 = vsel %vm203, %v252, 0.0
    %v263 = vadd.f32 %v261, %v262
    %v264 = vsel %vm203, %v253, 0.0
    %v265 = vadd.f32 %v263, %v264
    %v266 = vsel %vm203, %v254, 0.0
    %v267 = vadd.f32 %v265, %v266
    %v268 = vsel %vm203, %v255, 0.0
    %v269 = vadd.f32 %v267, %v268
    %v270 = vsel %vm203, %v256, 0.0
    %v271 = vadd.f32 %v269, %v270
    %272 = vadd.xlane.f32.xlu0 %v271
    %v273 = vpop.xlane.xlu0 %272
    %v274 = vrot.slane %v273, 4
    %v275 = vadd.f32 %v273, %v274
    %v276 = vrot.slane %v275, 2
    %v277 = vadd.f32 %v275, %v276
    %v278 = vrot.slane %v277, 1
    %v279 = vadd.f32 %v277, %v278
    %s280 = vtos %v279
    %s281 = smul.f32 %s280, 0.00048828125
    %s282 = sld [smem:[#allocation2 + $0x1]]
    %s283 = smul.f32 %s281, %s282
    %v284 = vstv %s283
    %v285 = vrsqrt.pop %v284
    %v286 = vmul.f32 %v285, %v284
    %v287 = vmul.f32 %v286, %v285
    %v288 = vmul.f32 0.5, %v287
    %v289 = vsub.f32 1.5, %v288
    %v290 = vmul.f32 %v285, %v289
    %v291 = vmul.f32 %v284, %v290
    %vm292 = vcmp.eq.f32.partialorder %v284, inf
    %v293 = vsel %vm292, %v284, %v291
    %vm294 = vcmp.eq.f32.partialorder %v284, 0.0
    %v295 = vand.u32 %v284, 2147483648
    %v296 = vsel %vm294, %v295, %v293
    %s297 = vtos %v296
    %v298 = vld [vmem:[%s1] sm:$0xff]
    %v299 = vld [vmem:[%s1 + $0x8] sm:$0xff]
    %v300 = vld [vmem:[%s1 + $0x10] sm:$0xff]
    %v301 = vld [vmem:[%s1 + $0x18] sm:$0xff]
    %v302 = vld [vmem:[%s1 + $0x20] sm:$0xff]
    %v303 = vld [vmem:[%s1 + $0x28] sm:$0xff]
    %v304 = vld [vmem:[%s1 + $0x30] sm:$0xff]
    %v305 = vld [vmem:[%s1 + $0x38] sm:$0xff]
    %v306 = vstv %s297
    %v307 = vmul.f32 %v298, %v306
    %v308 = vmul.f32 %v299, %v306
    %v309 = vmul.f32 %v300, %v306
    %v310 = vmul.f32 %v301, %v306
    %v311 = vmul.f32 %v302, %v306
    %v312 = vmul.f32 %v303, %v306
    %v313 = vmul.f32 %v304, %v306
    %v314 = vmul.f32 %v305, %v306
    %v315 = vadd.f32 %v141, %v307
    %v316 = vadd.f32 %v143, %v308
    %v317 = vadd.f32 %v146, %v309
    %v318 = vadd.f32 %v148, %v310
    %v319 = vadd.f32 %v151, %v311
    %v320 = vadd.f32 %v153, %v312
    %v321 = vadd.f32 %v156, %v313
    %v322 = vadd.f32 %v158, %v314
    %v323 = vpack.c.bf16 %v316, %v315
    %v324 = vpack.c.bf16 %v318, %v317
    %v325 = vpack.c.bf16 %v320, %v319
    %v326 = vpack.c.bf16 %v322, %v321
    %v327 = vld [vmem:[%s7] sm:$0xf]
    %v328 = vld [vmem:[%s7 + $0x4] sm:$0xf]
    %v329 = vld [vmem:[%s7 + $0x8] sm:$0xf]
    %v330 = vld [vmem:[%s7 + $0xc] sm:$0xf]
    %v331 = vld [vmem:[%s8] sm:$0x1]
    %v333 = vperm.slane %v331, 0
    %v339 = vunpack.c.l.b16 %v327
    %v340 = vunpack.c.l.b16 %v328
    %v341 = vunpack.c.l.b16 %v329
    %v342 = vunpack.c.l.b16 %v330
    %v343 = vpack.c.b16 %v340, %v339
    %v344 = vpack.c.b16 %v342, %v341
    %v348 = vsel %vm203, %v323, 0
    %v351 = vsel %vm203, %v324, 0
    %v354 = vsel %vm203, %v325, 0
    %v357 = vsel %vm203, %v326, 0
    %359 = vmatpush.bf16.msra.mxu0 0
    %360 = vmatpush.bf16.msra.mxu0 0
    %361 = vmatpush.bf16.msra.mxu0 0
    %362 = vmatpush.bf16.msra.mxu0 0
    %363 = vmatpush.bf16.msra.mxu0 0
    %364 = vmatpush.bf16.msra.mxu0 0
    %365 = vmatpush.bf16.msra.mxu0 %v344
    %366 = vmatpush.bf16.msra.mxu0 %v343
    %367 = vmatmul.bf16.gmra.mxu0 %v348
    %v368 = vpop.f32.mrf.mxu0
    %v369 = vadd.f32 %v333, %v368
    %v370 = vpop.f32.mrf.mxu0
    %v371 = vadd.f32 %v333, %v370
    %372 = vmatmul.bf16.gmra.mxu0 %v351
    %v373 = vpop.f32.mrf.mxu0
    %v374 = vadd.f32 %v333, %v373
    %v375 = vpop.f32.mrf.mxu0
    %v376 = vadd.f32 %v333, %v375
    %377 = vmatmul.bf16.gmra.mxu0 %v354
    %v378 = vpop.f32.mrf.mxu0
    %v379 = vadd.f32 %v333, %v378
    %v380 = vpop.f32.mrf.mxu0
    %v381 = vadd.f32 %v333, %v380
    %382 = vmatmul.bf16.gmra.mxu0 %v357
    %v383 = vpop.f32.mrf.mxu0
    %v384 = vadd.f32 %v333, %v383
    %v385 = vpop.f32.mrf.mxu0
    %v386 = vadd.f32 %v333, %v385
    %387 = vdwg.mxu0
    %v388 = vxor.u32 %v369, 2147483648
    %v389 = vxor.u32 %v371, 2147483648
    %v390 = vxor.u32 %v374, 2147483648
    %v391 = vxor.u32 %v376, 2147483648
    %v392 = vxor.u32 %v379, 2147483648
    %v393 = vxor.u32 %v381, 2147483648
    %v394 = vxor.u32 %v384, 2147483648
    %v395 = vxor.u32 %v386, 2147483648
    %v396 = vmul.f32 %v388, 1.442695
    %v397 = vpow.pop %v396
    %v398 = vmul.f32 %v389, 1.442695
    %v399 = vpow.pop %v398
    %v400 = vmul.f32 %v390, 1.442695
    %v401 = vpow.pop %v400
    %v402 = vmul.f32 %v391, 1.442695
    %v403 = vpow.pop %v402
    %v404 = vmul.f32 %v392, 1.442695
    %v405 = vpow.pop %v404
    %v406 = vmul.f32 %v393, 1.442695
    %v407 = vpow.pop %v406
    %v408 = vmul.f32 %v394, 1.442695
    %v409 = vpow.pop %v408
    %v410 = vmul.f32 %v395, 1.442695
    %v411 = vpow.pop %v410
    %v412 = vadd.f32 %v397, 1.0
    %v413 = vadd.f32 %v399, 1.0
    %v414 = vadd.f32 %v401, 1.0
    %v415 = vadd.f32 %v403, 1.0
    %v416 = vadd.f32 %v405, 1.0
    %v417 = vadd.f32 %v407, 1.0
    %v418 = vadd.f32 %v409, 1.0
    %v419 = vadd.f32 %v411, 1.0
    %v420 = vrcp.pop %v412
    %v421 = vmul.f32 %v412, %v420
    %v422 = vsub.f32 1.0, %v421
    %v423 = vmul.f32 %v420, %v422
    %v424 = vadd.f32 %v420, %v423
    %vm425 = vweird.f32 %v412
    %vm426 = vweird.f32 %v420
    %vm427 = vmor %vm425, %vm426
    %v428 = vsel %vm427, %v420, %v424
    %v429 = vand.u32 2147483647, %v412
    %vm430 = vcmp.eq.f32.partialorder %v429, 8.507059e+37
    %v431 = vand.u32 %v412, 2147483648
    %v432 = vor.u32 1.1754944e-38, %v431
    %v433 = vsel %vm430, %v432, %v428
    %v434 = vmul.f32 1.0, %v433
    %v435 = vrcp.pop %v413
    %v436 = vmul.f32 %v413, %v435
    %v437 = vsub.f32 1.0, %v436
    %v438 = vmul.f32 %v435, %v437
    %v439 = vadd.f32 %v435, %v438
    %vm440 = vweird.f32 %v413
    %vm441 = vweird.f32 %v435
    %vm442 = vmor %vm440, %vm441
    %v443 = vsel %vm442, %v435, %v439
    %v444 = vand.u32 2147483647, %v413
    %vm445 = vcmp.eq.f32.partialorder %v444, 8.507059e+37
    %v446 = vand.u32 %v413, 2147483648
    %v447 = vor.u32 1.1754944e-38, %v446
    %v448 = vsel %vm445, %v447, %v443
    %v449 = vmul.f32 1.0, %v448
    %v450 = vrcp.pop %v414
    %v451 = vmul.f32 %v414, %v450
    %v452 = vsub.f32 1.0, %v451
    %v453 = vmul.f32 %v450, %v452
    %v454 = vadd.f32 %v450, %v453
    %vm455 = vweird.f32 %v414
    %vm456 = vweird.f32 %v450
    %vm457 = vmor %vm455, %vm456
    %v458 = vsel %vm457, %v450, %v454
    %v459 = vand.u32 2147483647, %v414
    %vm460 = vcmp.eq.f32.partialorder %v459, 8.507059e+37
    %v461 = vand.u32 %v414, 2147483648
    %v462 = vor.u32 1.1754944e-38, %v461
    %v463 = vsel %vm460, %v462, %v458
    %v464 = vmul.f32 1.0, %v463
    %v465 = vrcp.pop %v415
    %v466 = vmul.f32 %v415, %v465
    %v467 = vsub.f32 1.0, %v466
    %v468 = vmul.f32 %v465, %v467
    %v469 = vadd.f32 %v465, %v468
    %vm470 = vweird.f32 %v415
    %vm471 = vweird.f32 %v465
    %vm472 = vmor %vm470, %vm471
    %v473 = vsel %vm472, %v465, %v469
    %v474 = vand.u32 2147483647, %v415
    %vm475 = vcmp.eq.f32.partialorder %v474, 8.507059e+37
    %v476 = vand.u32 %v415, 2147483648
    %v477 = vor.u32 1.1754944e-38, %v476
    %v478 = vsel %vm475, %v477, %v473
    %v479 = vmul.f32 1.0, %v478
    %v480 = vrcp.pop %v416
    %v481 = vmul.f32 %v416, %v480
    %v482 = vsub.f32 1.0, %v481
    %v483 = vmul.f32 %v480, %v482
    %v484 = vadd.f32 %v480, %v483
    %vm485 = vweird.f32 %v416
    %vm486 = vweird.f32 %v480
    %vm487 = vmor %vm485, %vm486
    %v488 = vsel %vm487, %v480, %v484
    %v489 = vand.u32 2147483647, %v416
    %vm490 = vcmp.eq.f32.partialorder %v489, 8.507059e+37
    %v491 = vand.u32 %v416, 2147483648
    %v492 = vor.u32 1.1754944e-38, %v491
    %v493 = vsel %vm490, %v492, %v488
    %v494 = vmul.f32 1.0, %v493
    %v495 = vrcp.pop %v417
    %v496 = vmul.f32 %v417, %v495
    %v497 = vsub.f32 1.0, %v496
    %v498 = vmul.f32 %v495, %v497
    %v499 = vadd.f32 %v495, %v498
    %vm500 = vweird.f32 %v417
    %vm501 = vweird.f32 %v495
    %vm502 = vmor %vm500, %vm501
    %v503 = vsel %vm502, %v495, %v499
    %v504 = vand.u32 2147483647, %v417
    %vm505 = vcmp.eq.f32.partialorder %v504, 8.507059e+37
    %v506 = vand.u32 %v417, 2147483648
    %v507 = vor.u32 1.1754944e-38, %v506
    %v508 = vsel %vm505, %v507, %v503
    %v509 = vmul.f32 1.0, %v508
    %v510 = vrcp.pop %v418
    %v511 = vmul.f32 %v418, %v510
    %v512 = vsub.f32 1.0, %v511
    %v513 = vmul.f32 %v510, %v512
    %v514 = vadd.f32 %v510, %v513
    %vm515 = vweird.f32 %v418
    %vm516 = vweird.f32 %v510
    %vm517 = vmor %vm515, %vm516
    %v518 = vsel %vm517, %v510, %v514
    %v519 = vand.u32 2147483647, %v418
    %vm520 = vcmp.eq.f32.partialorder %v519, 8.507059e+37
    %v521 = vand.u32 %v418, 2147483648
    %v522 = vor.u32 1.1754944e-38, %v521
    %v523 = vsel %vm520, %v522, %v518
    %v524 = vmul.f32 1.0, %v523
    %v525 = vrcp.pop %v419
    %v526 = vmul.f32 %v419, %v525
    %v527 = vsub.f32 1.0, %v526
    %v528 = vmul.f32 %v525, %v527
    %v529 = vadd.f32 %v525, %v528
    %vm530 = vweird.f32 %v419
    %vm531 = vweird.f32 %v525
    %vm532 = vmor %vm530, %vm531
    %v533 = vsel %vm532, %v525, %v529
    %v534 = vand.u32 2147483647, %v419
    %vm535 = vcmp.eq.f32.partialorder %v534, 8.507059e+37
    %v536 = vand.u32 %v419, 2147483648
    %v537 = vor.u32 1.1754944e-38, %v536
    %v538 = vsel %vm535, %v537, %v533
    %v539 = vmul.f32 1.0, %v538
    %540 = vst [vmem:[%s10] sm:$0xff] %v434
    %541 = vst [vmem:[%s10 + $0x8] sm:$0xff] %v449
    %542 = vst [vmem:[%s10 + $0x10] sm:$0xff] %v464
    %543 = vst [vmem:[%s10 + $0x18] sm:$0xff] %v479
    %544 = vst [vmem:[%s10 + $0x20] sm:$0xff] %v494
    %545 = vst [vmem:[%s10 + $0x28] sm:$0xff] %v509
    %546 = vst [vmem:[%s10 + $0x30] sm:$0xff] %v524
    %547 = vst [vmem:[%s10 + $0x38] sm:$0xff] %v539
    %vm548 = vcmp.lt.s32.totalorder %v221, 48
    %v549 = vsub.f32 %v51, %v434
    %v550 = vsub.f32 %v52, %v449
    %v551 = vsub.f32 %v53, %v464
    %v552 = vsub.f32 %v54, %v479
    %v553 = vsub.f32 %v55, %v494
    %v554 = vsub.f32 %v56, %v509
    %v555 = vsub.f32 %v57, %v524
    %v556 = vsub.f32 %v58, %v539
    %v557 = vsel %vm548, %v549, 0.0
    %v558 = vsel %vm548, %v550, 0.0
    %v559 = vsel %vm548, %v551, 0.0
    %v560 = vsel %vm548, %v552, 0.0
    %v561 = vsel %vm548, %v553, 0.0
    %v562 = vsel %vm548, %v554, 0.0
    %v563 = vsel %vm548, %v555, 0.0
    %v564 = vsel %vm548, %v556, 0.0
    %v565 = vmul.f32 %v557, %v557
    %v566 = vmul.f32 %v558, %v558
    %v567 = vmul.f32 %v559, %v559
    %v568 = vmul.f32 %v560, %v560
    %v569 = vmul.f32 %v561, %v561
    %v570 = vmul.f32 %v562, %v562
    %v571 = vmul.f32 %v563, %v563
    %v572 = vmul.f32 %v564, %v564
    %v573 = vadd.f32 %v565, %v566
    %v574 = vadd.f32 %v573, %v567
    %v575 = vadd.f32 %v574, %v568
    %v576 = vadd.f32 %v575, %v569
    %v577 = vadd.f32 %v576, %v570
    %v578 = vadd.f32 %v577, %v571
    %v579 = vadd.f32 %v578, %v572
    %580 = vadd.xlane.f32.xlu0 %v579
    %v581 = vpop.xlane.xlu0 %580
    %v582 = vrot.slane %v581, 4
    %v583 = vadd.f32 %v581, %v582
    %v584 = vrot.slane %v583, 2
    %v585 = vadd.f32 %v583, %v584
    %v586 = vrot.slane %v585, 1
    %v587 = vadd.f32 %v585, %v586
    %s588 = vtos %v587
    %vm589 = vcmp.eq.s32.totalorder %v221, 0
    %v590 = vmul.f32 %v246, 0.0009765625
    %v591 = vsel %vm589, %v590, 0.0
    %vm592 = vcmp.eq.s32.totalorder %v221, 1
    %v593 = vstv %s244
    %v594 = vmul.f32 %v593, %v246
    %v595 = vadd.f32 %v248, %v594
    %v596 = vmul.f32 %v595, 0.0009765625
    %v597 = vsel %vm592, %v596, 0.0
    %v598 = vadd.f32 %v591, %v597
    %vm599 = vcmp.eq.s32.totalorder %v221, 2
    %v600 = vstv %s588
    %v601 = vsel %vm599, %v600, 0.0
    %v602 = vadd.f32 %v598, %v601
    %603 = vst [vmem:[%s11] sm:$0xff] %v602
    // Predicated region
    $region46: #{_witt_device.1} parent=1 // pred_check
      _
    $region47: #{_witt_device.1} parent=1 // pred_check_branch
      %605 = sbr.rel (0) target = $region49
    $region48: #{_witt_device.1} parent=1 // pred_region
      _
    $region49: #{_witt_device.1} parent=1 // pred_fallthru
      _
    // Predicated region
    $region50: #{_witt_device.1} parent=1 // pred_check
      _
    $region51: #{_witt_device.1} parent=1 // pred_check_branch
      %607 = sbr.rel (0) target = $region53
    $region52: #{_witt_device.1} parent=1 // pred_region
      _
    $region53: #{_witt_device.1} parent=1 // pred_fallthru
      _
    // Predicated region
    $region54: #{_witt_device.1} parent=1 // pred_check
      _
    $region55: #{_witt_device.1} parent=1 // pred_check_branch
      %609 = sbr.rel (0) target = $region57
    $region56: #{_witt_device.1} parent=1 // pred_region
      _
    $region57: #{_witt_device.1} parent=1 // pred_fallthru
      _
    // Predicated region
    $region58: #{_witt_device.1} parent=1 // pred_check
      _
    $region59: #{_witt_device.1} parent=1 // pred_check_branch
      %611 = sbr.rel (0) target = $region61
    $region60: #{_witt_device.1} parent=1 // pred_region
      _
    $region61: #{_witt_device.1} parent=1 // pred_fallthru
      _
    %612 = vsyncpa [#allocation3], 1

</llo_original>
